<compile_context>
chip_gen: v5e
topology: v5e:2x2
jax: 0.10.0
libtpu: 0.0.40
codegen_flags: <defaults>
</compile_context>

<pallas_src>
import functools

import jax
import jax.numpy as jnp
from jax.experimental import pallas as pl
from jax.experimental.pallas import tpu as pltpu


def _round_up(x, m):
    return (x + m - 1) // m * m


def _vmem_limit_bytes():
    """Generation-aware scoped-VMEM limit (bytes) with headroom below the
    physical per-core VMEM (128 MiB on v5e/v6e, 64 MiB on v7x)."""
    try:
        phys = int(pltpu.get_tpu_info().vmem_capacity_bytes)
    except Exception:
        phys = 64 * 1024 * 1024          # conservative: v7x per-core VMEM
    limit = min(phys - 16 * 1024 * 1024, 100 * 1024 * 1024)
    return max(limit, 32 * 1024 * 1024)


def _choose_tm(m, kp, dp, in_sz, out_sz, budget_bytes):
    """Largest power-of-two row tile (<=1024) whose pipelined working set fits
    the VMEM budget.  Accounting (per review): X and out tiles are
    double-buffered; W and bias are also double-buffered today despite their
    constant index_map; output tiles use the *output* dtype."""
    fixed = 2 * (kp * dp * in_sz + dp * 4)           # resident W + f32 bias
    tm = 1024
    while tm > 8:
        need = 2 * tm * (kp * in_sz + dp * out_sz) + fixed
        if need <= budget_bytes:
            break
        tm //= 2
    tm = max(tm, 8)
    if m <= tm:
        return _round_up(m, 8)
    return tm


def _patch_embed_kernel(x_ref, w_ref, b_ref, o_ref):
    # x_ref: (TM, Kp)   w_ref: (Kp, Dp)   b_ref: (1, Dp) float32   o_ref: (TM, Dp)
    acc = jnp.dot(x_ref[...], w_ref[...], preferred_element_type=jnp.float32)
    o_ref[...] = (acc + b_ref[...]).astype(o_ref.dtype)


@functools.partial(jax.jit, static_argnames=("patch_size", "compute_dtype"))
def patch_embed_forward(x, weight, bias, patch_size, compute_dtype=jnp.bfloat16):
    """x: (B, C, H, W) NCHW; weight: (D, C, P, P) OIHW; bias: (D,).
    Returns (B, num_patches, D) ==
        nn.Conv2d(C, D, kernel_size=P, stride=P)(x).flatten(2).transpose(1, 2)
    with norm = Identity (default norm_layer=None).
    compute_dtype: matmul operand dtype (default bf16, f32 accumulation);
    pass None for exact f32.  Output keeps x.dtype.
    """
    B, C, H, W = x.shape
    D = weight.shape[0]
    P = patch_size
    assert H % P == 0 and W % P == 0
    Hp, Wp = H // P, W // P
    N = Hp * Wp
    K = C * P * P
    M = B * N

    # --- patch extraction / layout glue (same jit; XLA may fuse it into the
    #     pallas operand via allow_input_fusion below) ---
    # (B, C, Hp, P, Wp, P) -> (B, Hp, Wp, C, P, P) -> (B*N, C*P*P)
    xp = x.reshape(B, C, Hp, P, Wp, P)
    xp = jnp.transpose(xp, (0, 2, 4, 1, 3, 5)).reshape(M, K)
    w2d = weight.reshape(D, K).T                      # (K, D)
    b2d = bias.reshape(1, D).astype(jnp.float32)      # (1, D) f32

    if compute_dtype is not None:
        xp = xp.astype(compute_dtype)
        w2d = w2d.astype(compute_dtype)

    # --- lane-dense / tile-aligned padding, only where actually needed ---
    Kp = _round_up(K, 128)
    Dp = _round_up(D, 128)
    in_sz = jnp.dtype(xp.dtype).itemsize
    out_dtype = x.dtype
    out_sz = jnp.dtype(out_dtype).itemsize

    vmem_limit = _vmem_limit_bytes()
    TM = _choose_tm(M, Kp, Dp, in_sz, out_sz,
                    budget_bytes=vmem_limit - 8 * 1024 * 1024)
    Mp = _round_up(M, TM)

    if (Mp, Kp) != (M, K):
        xp = jnp.pad(xp, ((0, Mp - M), (0, Kp - K)))
    if (Kp, Dp) != (K, D):
        w2d = jnp.pad(w2d, ((0, Kp - K), (0, Dp - D)))
    if Dp != D:
        b2d = jnp.pad(b2d, ((0, 0), (0, Dp - D)))

    cost = pl.CostEstimate(
        flops=2 * Mp * Kp * Dp,
        transcendentals=0,
        bytes_accessed=(Mp * Kp * in_sz + Kp * Dp * in_sz + Dp * 4
                        + Mp * Dp * out_sz),
    )

    out = pl.pallas_call(
        _patch_embed_kernel,
        out_shape=jax.ShapeDtypeStruct((Mp, Dp), out_dtype),
        grid=(Mp // TM,),
        in_specs=[
            pl.BlockSpec((TM, Kp), lambda i: (i, 0)),   # X tile, pipelined over M
            pl.BlockSpec((Kp, Dp), lambda i: (0, 0)),   # W resident across grid
            pl.BlockSpec((1, Dp), lambda i: (0, 0)),    # bias resident
        ],
        out_specs=pl.BlockSpec((TM, Dp), lambda i: (i, 0)),
        compiler_params=pltpu.CompilerParams(
            dimension_semantics=("parallel",),          # megacore sharding on v7x
            vmem_limit_bytes=vmem_limit,
            # Let XLA fuse the transpose/pad/cast producer into the activation
            # operand (avoids materializing xp in HBM).  Hint only; safe if
            # the producer is not fusable.
            allow_input_fusion=[True, False, False],
        ),
        cost_estimate=cost,
    )(xp, w2d, b2d)

    if Mp != M or Dp != D:
        out = out[:M, :D]
    return out.reshape(B, N, D)


if __name__ == "__main__":
    # Small config consistent with the module: patch_size=4, in_chans=4,
    # embed_dim=32, image 16x16, batch 2  ->  num_patches = 16.
    B, C, H, W = 2, 4, 16, 16
    P = 4
    D = 32

    key = jax.random.PRNGKey(0)
    kx, kw, kb = jax.random.split(key, 3)

    x = jax.random.normal(kx, (B, C, H, W), dtype=jnp.float32)
    weight = jax.random.normal(kw, (D, C, P, P), dtype=jnp.float32) * 0.02
    bias = jax.random.normal(kb, (D,), dtype=jnp.float32) * 0.01

    # Reference: plain-JAX conv (same semantics as torch Conv2d, NCHW).
    ref = jax.lax.conv_general_dilated(
        x, weight, window_strides=(P, P), padding="VALID",
        dimension_numbers=("NCHW", "OIHW", "NCHW"),
    ) + bias.reshape(1, D, 1, 1)
    ref = ref.reshape(B, D, -1).transpose(0, 2, 1)  # flatten(2).transpose(1,2)

    # Exact f32 path (tight tolerance).
    out_f32 = patch_embed_forward(x, weight, bias, P, compute_dtype=None)
    out_f32 = jax.block_until_ready(out_f32)
    assert out_f32.shape == (B, (H // P) * (W // P), D)
    assert jnp.allclose(out_f32, ref, atol=1e-4, rtol=1e-4)

    # Default bf16-compute path (f32 accumulation; looser tolerance).
    out = patch_embed_forward(x, weight, bias, P)
    out = jax.block_until_ready(out)
    assert out.shape == (B, (H // P) * (W // P), D)
    assert jnp.allclose(out, ref, atol=2e-2, rtol=5e-2)

    print("KERNEL_OK")
</pallas_src>

<mosaic_0001>
module attributes {stable_mosaic.version = 11 : i64} {
  func.func @_patch_embed_kernel(%arg0: i32, %arg1: memref<32x128xf32, #tpu.memory_space<vmem>>, %arg2: memref<128x128xf32, #tpu.memory_space<vmem>>, %arg3: memref<1x128xf32, #tpu.memory_space<vmem>>, %arg4: memref<32x128xf32, #tpu.memory_space<vmem>>) attributes {dimension_semantics = [#tpu.dimension_semantics<parallel>], iteration_bounds = array<i64: 1>, scalar_prefetch = 0 : i64, scratch_operands = 0 : i64, tpu.core_type = #tpu.core_type<tc>, window_params = [{transform_indices = @transform_0, window_bounds = array<i64: 32, 128>}, {pipeline_mode = #tpu.pipeline_mode<synchronous>, transform_indices = @transform_1, window_bounds = array<i64: 128, 128>}, {pipeline_mode = #tpu.pipeline_mode<synchronous>, transform_indices = @transform_2, window_bounds = array<i64: 1, 128>}, {transform_indices = @transform_3, window_bounds = array<i64: 32, 128>}]} {
    %c0 = arith.constant 0 : index
    %c0_0 = arith.constant 0 : index
    %0 = vector.load %arg1[%c0, %c0_0] : memref<32x128xf32, #tpu.memory_space<vmem>>, vector<32x128xf32>
    %c0_1 = arith.constant 0 : index
    %c0_2 = arith.constant 0 : index
    %1 = vector.load %arg2[%c0_1, %c0_2] : memref<128x128xf32, #tpu.memory_space<vmem>>, vector<128x128xf32>
    %cst = arith.constant dense<0.000000e+00> : vector<32x128xf32>
    %2 = tpu.matmul %0, %1, %cst {dimension_numbers = #tpu.dot_dimension_numbers<[1], [0], [0], [1], [0, 0, 1, 1], [], []>} : vector<32x128xf32>, vector<128x128xf32>, vector<32x128xf32> -> vector<32x128xf32>
    %c0_3 = arith.constant 0 : index
    %c0_4 = arith.constant 0 : index
    %3 = vector.load %arg3[%c0_3, %c0_4] : memref<1x128xf32, #tpu.memory_space<vmem>>, vector<1x128xf32>
    %4 = vector.broadcast %3 : vector<1x128xf32> to vector<32x128xf32>
    %5 = arith.addf %2, %4 : vector<32x128xf32>
    %c0_5 = arith.constant 0 : index
    %c0_6 = arith.constant 0 : index
    %6 = vector.load %arg4[%c0_5, %c0_6] : memref<32x128xf32, #tpu.memory_space<vmem>>, vector<32x128xf32>
    tpu.vector_store %arg4[%c0_5, %c0_6], %5 {strides = array<i32>} : memref<32x128xf32, #tpu.memory_space<vmem>>, vector<32x128xf32>,
    return
  }
  func.func @transform_0(%arg0: i32) -> (i32, i32) {
    %c0_i32 = arith.constant 0 : i32
    %c0_i32_0 = arith.constant 0 : i32
    return %arg0, %c0_i32 : i32, i32
  }
  func.func @transform_1(%arg0: i32) -> (i32, i32) {
    %c0_i32 = arith.constant 0 : i32
    %c0_i32_0 = arith.constant 0 : i32
    %c0_i32_1 = arith.constant 0 : i32
    return %c0_i32, %c0_i32_0 : i32, i32
  }
  func.func @transform_2(%arg0: i32) -> (i32, i32) {
    %c0_i32 = arith.constant 0 : i32
    %c0_i32_0 = arith.constant 0 : i32
    %c0_i32_1 = arith.constant 0 : i32
    return %c0_i32, %c0_i32_0 : i32, i32
  }
  func.func @transform_3(%arg0: i32) -> (i32, i32) {
    %c0_i32 = arith.constant 0 : i32
    %c0_i32_0 = arith.constant 0 : i32
    return %arg0, %c0_i32 : i32, i32
  }
}

</mosaic_0001>

<llo_original>
// kernel: patch_embed_forward.2
$region0: #{patch_embed_forward.2}
  #allocation0 [shape = 'u32[]', space=smem, size = 0x4, offset = 0x4, fixed_abs, tag = 'smem constant byte address 0x4 - core index']
  #allocation1 [shape = 'u32[72,128]{1,0:T(1,128)}', space=vmem, size = 0x9000, scoped, tag = 'internal scratch']
  #allocation2 [shape = 'u32[2048]{0}', space=vmem, size = 0x2000, scoped, tag = 'scoped memory for patch_embed_forward.2']
  #allocation3 [shape = 'u32[2048]{0}', space=vmem, size = 0x2000, scoped, tag = 'scoped memory for patch_embed_forward.2']
  #allocation4 [shape = 'u32[2048]{0}', space=vmem, size = 0x2000, scoped, tag = 'scoped memory for patch_embed_forward.2']
  #allocation5 [shape = 'u32[2048]{0}', space=vmem, size = 0x2000, scoped, tag = 'scoped memory for patch_embed_forward.2']
  #allocation6 [shape = 'u32[2048]{0}', space=vmem, size = 0x2000, scoped, tag = 'scoped memory for patch_embed_forward.2']
  %s0 = inlined_call_operand.vmem [shape: f32[128,128], index: 0, kind: input, shape index: {}]
  %s1 = inlined_call_operand.vmem [shape: f32[1,128], index: 1, kind: input, shape index: {}]
  %s2 = inlined_call_operand.vmem [shape: f32[32,64], index: 2, kind: input, shape index: {}]
  %s3 = inlined_call_operand.<no memory space> [shape: f32[], index: 3, kind: input, shape index: {}]
  %s4 = inlined_call_operand.hbm [shape: f32[32,128], index: 4, kind: output, shape index: {}]
  %s5 = sld [smem:[#allocation0]]
  $region22: #{patch_embed_forward.2} parent=0
    _
  %s7 = ssub.s32 1, %s5
  %s8 = scalar_select 0, %s7, %s5
  %v9 = vstv %s3
  $region1: #{patch_embed_forward.2} parent=0
    #allocation7 [shape = 'u8[16384]{0}', space=vmem, size = 0x4000, scoped, tag = 'output window, operand 0, single buffered']
    #allocation8 [shape = 's32[1]{0}', space=sflag, size = 0x4, scoped, tag = 'scoped memory for patch_embed_forward.2']
    #allocation9 [shape = 'u8[16384]{0}', space=vmem, size = 0x4000, dematerialized = true, scoped, tag = 'FusionAdapter Buffer %fusion.1 = f32[32,128]{1,0:T(8,128)} fusion(%param_2.1, %param_3), kind=kLoop, calls=%fused_computation.2.clone, metadata={op_name="jit(patch_embed_forward)/jit(_pad)/pad" stack_frame_id=11}']
    %10 = vsyncpa [#allocation8], 0
    // Predicated region
    $region2: #{patch_embed_forward.2} parent=1 // pred_check
      _
    $region3: #{patch_embed_forward.2} parent=1 // pred_check_branch
      %12 = sbr.rel (0) target = $region5
    $region4: #{patch_embed_forward.2} parent=1 // pred_region
      _
    $region5: #{patch_embed_forward.2} parent=1 // pred_fallthru
      _
    // Predicated region
    $region6: #{patch_embed_forward.2} parent=1 // pred_check
      _
    $region7: #{patch_embed_forward.2} parent=1 // pred_check_branch
      %14 = sbr.rel (0) target = $region9
    $region8: #{patch_embed_forward.2} parent=1 // pred_region
      _
    $region9: #{patch_embed_forward.2} parent=1 // pred_fallthru
      _
    // Predicated region
    $region10: #{patch_embed_forward.2} parent=1 // pred_check
      _
    $region11: #{patch_embed_forward.2} parent=1 // pred_check_branch
      %16 = sbr.rel (0) target = $region13
    $region12: #{patch_embed_forward.2} parent=1 // pred_region
      _
    $region13: #{patch_embed_forward.2} parent=1 // pred_fallthru
      _
    %v17 = vld [vmem:[%s2] sm:$0xff]
    %v18 = vlaneseq
    %v19 = vand.u32 %v18, 127
    %vm21 = vcmp.lt.s32.totalorder %v19, 64
    %v22 = vsel %vm21, %v17, %v9
    %s24 = ssub.s32 256, 1
    %25 = vst [vmem:[#allocation9] sm:%s24] %v22
    %s26 = scalar_lea.vmem %s2, 8
    %v27 = vld [vmem:[%s26] sm:$0xff]
    %v28 = vlaneseq
    %v29 = vand.u32 %v28, 127
    %vm31 = vcmp.lt.s32.totalorder %v29, 64
    %v32 = vsel %vm31, %v27, %v9
    %s33 = scalar_lea.vmem [#allocation9], 8
    %s35 = ssub.s32 256, 1
    %36 = vst [vmem:[%s33] sm:%s35] %v32
    %s37 = scalar_lea.vmem %s2, 16
    %v38 = vld [vmem:[%s37] sm:$0xff]
    %v39 = vlaneseq
    %v40 = vand.u32 %v39, 127
    %vm42 = vcmp.lt.s32.totalorder %v40, 64
    %v43 = vsel %vm42, %v38, %v9
    %s44 = scalar_lea.vmem [#allocation9], 16
    %s46 = ssub.s32 256, 1
    %47 = vst [vmem:[%s44] sm:%s46] %v43
    %s48 = scalar_lea.vmem %s2, 24
    %v49 = vld [vmem:[%s48] sm:$0xff]
    %v50 = vlaneseq
    %v51 = vand.u32 %v50, 127
    %vm53 = vcmp.lt.s32.totalorder %v51, 64
    %v54 = vsel %vm53, %v49, %v9
    %s55 = scalar_lea.vmem [#allocation9], 24
    %s57 = ssub.s32 256, 1
    %58 = vst [vmem:[%s55] sm:%s57] %v54
    %v59 = vld [vmem:[#allocation9] sm:$0xff]
    %v60 = vld [vmem:[#allocation9 + $0x8] sm:$0xff]
    %v61 = vld [vmem:[#allocation9 + $0x10] sm:$0xff]
    %v62 = vld [vmem:[#allocation9 + $0x18] sm:$0xff]
    %v63 = vld [vmem:[%s0] sm:$0xff]
    %v64 = vld [vmem:[%s0 + $0x8] sm:$0xff]
    %v65 = vld [vmem:[%s0 + $0x10] sm:$0xff]
    %v66 = vld [vmem:[%s0 + $0x18] sm:$0xff]
    %v67 = vld [vmem:[%s0 + $0x20] sm:$0xff]
    %v68 = vld [vmem:[%s0 + $0x28] sm:$0xff]
    %v69 = vld [vmem:[%s0 + $0x30] sm:$0xff]
    %v70 = vld [vmem:[%s0 + $0x38] sm:$0xff]
    %v71 = vld [vmem:[%s0 + $0x40] sm:$0xff]
    %v72 = vld [vmem:[%s0 + $0x48] sm:$0xff]
    %v73 = vld [vmem:[%s0 + $0x50] sm:$0xff]
    %v74 = vld [vmem:[%s0 + $0x58] sm:$0xff]
    %v75 = vld [vmem:[%s0 + $0x60] sm:$0xff]
    %v76 = vld [vmem:[%s0 + $0x68] sm:$0xff]
    %v77 = vld [vmem:[%s0 + $0x70] sm:$0xff]
    %v78 = vld [vmem:[%s0 + $0x78] sm:$0xff]
    %v79 = vld [vmem:[%s1] sm:$0x1]
    %v81 = vperm.slane %v79, 0
    %83 = vmatpush.msra.mxu0 %v78
    %84 = vmatpush.msra.mxu0 %v77
    %85 = vmatpush.msra.mxu0 %v76
    %86 = vmatpush.msra.mxu0 %v75
    %87 = vmatpush.msra.mxu0 %v74
    %88 = vmatpush.msra.mxu0 %v73
    %89 = vmatpush.msra.mxu0 %v72
    %90 = vmatpush.msra.mxu0 %v71
    %91 = vmatpush.msra.mxu0 %v70
    %92 = vmatpush.msra.mxu0 %v69
    %93 = vmatpush.msra.mxu0 %v68
    %94 = vmatpush.msra.mxu0 %v67
    %95 = vmatpush.msra.mxu0 %v66
    %96 = vmatpush.msra.mxu0 %v65
    %97 = vmatpush.msra.mxu0 %v64
    %98 = vmatpush.msra.mxu0 %v63
    %99 = vmatmul.f32.gmra.mxu0 %v59
    %v100 = vpop.f32.mrf.mxu0
    %v101 = vadd.f32 %v81, %v100
    %102 = vmatmul.f32.gmra.mxu0 %v60
    %v103 = vpop.f32.mrf.mxu0
    %v104 = vadd.f32 %v81, %v103
    %105 = vmatmul.f32.gmra.mxu0 %v61
    %v106 = vpop.f32.mrf.mxu0
    %v107 = vadd.f32 %v81, %v106
    %108 = vmatmul.f32.gmra.mxu0 %v62
    %v109 = vpop.f32.mrf.mxu0
    %v110 = vadd.f32 %v81, %v109
    %111 = vdwg.mxu0
    %112 = vst [vmem:[#allocation7] sm:$0xff] %v101
    %113 = vst [vmem:[#allocation7 + $0x8] sm:$0xff] %v104
    %114 = vst [vmem:[#allocation7 + $0x10] sm:$0xff] %v107
    %115 = vst [vmem:[#allocation7 + $0x18] sm:$0xff] %v110
    // Predicated region
    $region14: #{patch_embed_forward.2} parent=1 // pred_check
      _
    $region15: #{patch_embed_forward.2} parent=1 // pred_check_branch
      %117 = sbr.rel (0) target = $region17
    $region16: #{patch_embed_forward.2} parent=1 // pred_region
      %119 = vsyncadd [#allocation8], 0
      %s120 = sshll.u32 [#allocation7], 4
      %s121 = int_to_ptr.vmem [resolvable:$true] %s120
      %s122 = sshll.u32 %s4, 4
      %s123 = int_to_ptr.hbm [resolvable:$true] %s122
      %128 = dma.vmem_to_hbm [thread:$0]  %s121, 512, %s123, [#allocation8], 128, 128, 8
    $region17: #{patch_embed_forward.2} parent=1 // pred_fallthru
      _
    // Predicated region
    $region18: #{patch_embed_forward.2} parent=1 // pred_check
      _
    $region19: #{patch_embed_forward.2} parent=1 // pred_check_branch
      %130 = sbr.rel (0) target = $region21
    $region20: #{patch_embed_forward.2} parent=1 // pred_region
      %132 = dma.done [#allocation8], 512
    $region21: #{patch_embed_forward.2} parent=1 // pred_fallthru
      _
    %133 = vsyncpa [#allocation8], 1

</llo_original>
